<compile_context>
chip_gen: v7x
topology: tpu7x:2x2x1
jax: 0.10.0
libtpu: 0.0.40
codegen_flags: <defaults>
</compile_context>

<pallas_src>
import functools

import jax
import jax.numpy as jnp
from jax.experimental import pallas as pl
from jax.experimental.pallas import tpu as pltpu

_LANES = 128
_MAX_BLOCK_ROWS = 1024   # (1024, 128) f32 = 512 KiB per input buffer
_NUM_SPLITS = 2          # leading "parallel" grid axis (uses both TCs on v7x)
_SMOOTH = 1.0            # matches the PyTorch default `smooth=1`


def _round_up(x, m):
    return ((x + m - 1) // m) * m


def _f1_partial_kernel(x_ref, y_ref, pxy_ref, ptot_ref, acc_xy, acc_tot, *,
                       rows, block_rows, steps, needs_mask):
    i = pl.program_id(1)

    @pl.when(i == 0)
    def _init():
        acc_xy[...] = jnp.zeros_like(acc_xy)
        acc_tot[...] = jnp.zeros_like(acc_tot)

    x = x_ref[...].astype(jnp.float32)
    y = y_ref[...].astype(jnp.float32)

    if needs_mask:
        blk = pl.program_id(0) * steps + i      # logical (un-clamped) block id
        full_blocks = rows // block_rows        # static Python int

        @pl.when(blk < full_blocks)
        def _full_block():
            acc_xy[...] += x * y
            acc_tot[...] += x + y

        @pl.when(blk >= full_blocks)
        def _ragged_or_dead_block():
            row_ids = jax.lax.broadcasted_iota(
                jnp.int32, (block_rows, _LANES), 0)
            valid = blk * block_rows + row_ids < rows
            xm = jnp.where(valid, x, 0.0)
            ym = jnp.where(valid, y, 0.0)
            acc_xy[...] += xm * ym
            acc_tot[...] += xm + ym
    else:
        acc_xy[...] += x * y
        acc_tot[...] += x + y

    @pl.when(i == steps - 1)
    def _finalize():
        # Single cross-sublane reduce per split; lane reduce happens outside.
        pxy_ref[0] = jnp.sum(acc_xy[...], axis=0, keepdims=True)
        ptot_ref[0] = jnp.sum(acc_tot[...], axis=0, keepdims=True)


def f1_loss(inputs, targets, smooth=_SMOOTH):
    """Pallas TPU implementation of F1_Loss.forward."""
    x = inputs.reshape(-1)
    y = targets.reshape(-1)
    n = x.shape[0]

    # Lane alignment: only pad (with exact zeros) when n % 128 != 0. Aligned
    # inputs (the common case) are read exactly once with no extra HBM copy.
    if n % _LANES != 0:
        n_pad = _round_up(n, _LANES)
        x = jnp.pad(x, (0, n_pad - n))
        y = jnp.pad(y, (0, n_pad - n))
        n = n_pad

    rows = n // _LANES
    x2 = x.reshape(rows, _LANES)
    y2 = y.reshape(rows, _LANES)

    # Biggest lane-dense block that fits comfortably in VMEM on every gen.
    block_rows = rows if rows <= _MAX_BLOCK_ROWS else _MAX_BLOCK_ROWS
    nblocks = pl.cdiv(rows, block_rows)
    nsplits = min(_NUM_SPLITS, nblocks)
    steps = pl.cdiv(nblocks, nsplits)
    # Mask only if some block is ragged or lies entirely past the data end.
    needs_mask = (nsplits * steps * block_rows) != rows

    def in_index_map(s, i):
        # Clamp dead blocks (past the end) onto the last valid block so no
        # out-of-range DMA is issued; the in-kernel mask zeroes them out.
        return (jnp.minimum(s * steps + i, nblocks - 1), 0)

    kernel = functools.partial(
        _f1_partial_kernel, rows=rows, block_rows=block_rows, steps=steps,
        needs_mask=needs_mask)

    partial_xy, partial_tot = pl.pallas_call(
        kernel,
        out_shape=(
            jax.ShapeDtypeStruct((nsplits, 1, _LANES), jnp.float32),
            jax.ShapeDtypeStruct((nsplits, 1, _LANES), jnp.float32),
        ),
        grid_spec=pltpu.PrefetchScalarGridSpec(
            num_scalar_prefetch=0,
            grid=(nsplits, steps),
            in_specs=[
                pl.BlockSpec((block_rows, _LANES), in_index_map),
                pl.BlockSpec((block_rows, _LANES), in_index_map),
            ],
            out_specs=[
                pl.BlockSpec((1, 1, _LANES), lambda s, i: (s, 0, 0)),
                pl.BlockSpec((1, 1, _LANES), lambda s, i: (s, 0, 0)),
            ],
            scratch_shapes=[
                pltpu.VMEM((block_rows, _LANES), jnp.float32),
                pltpu.VMEM((block_rows, _LANES), jnp.float32),
            ],
        ),
        compiler_params=pltpu.CompilerParams(
            dimension_semantics=("parallel", "arbitrary"),
        ),
    )(x2, y2)

    # Combine the tiny per-split partials (scalar epilogue, negligible cost).
    intersection = jnp.sum(partial_xy)
    total = jnp.sum(partial_tot)
    f1 = 2.0 * (intersection + smooth) / (total + smooth)
    return 1.0 - f1


def _f1_loss_ref(inputs, targets, smooth=1.0):
    x = inputs.reshape(-1).astype(jnp.float32)
    y = targets.reshape(-1).astype(jnp.float32)
    intersection = jnp.sum(x * y)
    total = jnp.sum(x + y)
    union = total - intersection
    f1 = 2.0 * (intersection + smooth) / (union + intersection + smooth)
    return 1.0 - f1


if __name__ == "__main__":
    key = jax.random.PRNGKey(0)
    k1, k2, k3, k4 = jax.random.split(key, 4)

    # Primary small segmentation-style NCHW case.
    inputs = jax.nn.sigmoid(
        jax.random.normal(k1, (2, 4, 16, 16), dtype=jnp.float32))
    targets = (jax.random.uniform(k2, (2, 4, 16, 16)) > 0.5).astype(jnp.float32)

    loss = jax.block_until_ready(f1_loss(inputs, targets))
    ref = jax.block_until_ready(_f1_loss_ref(inputs, targets))
    assert jnp.allclose(loss, ref, rtol=1e-5, atol=1e-5), (loss, ref)

    # Second check exercising the multi-split grid + ragged-tail mask path.
    inputs2 = jax.nn.sigmoid(
        jax.random.normal(k3, (2, 4, 128, 130), dtype=jnp.float32))
    targets2 = (jax.random.uniform(k4, (2, 4, 128, 130)) > 0.5).astype(
        jnp.float32)
    loss2 = jax.block_until_ready(f1_loss(inputs2, targets2))
    ref2 = jax.block_until_ready(_f1_loss_ref(inputs2, targets2))
    assert jnp.allclose(loss2, ref2, rtol=1e-5, atol=1e-5), (loss2, ref2)

    print("KERNEL_OK")
</pallas_src>

<mosaic_0001>
module attributes {stable_mosaic.version = 11 : i64} {
  func.func @_f1_partial_kernel(%arg0: i32, %arg1: i32, %arg2: memref<16x128xf32, #tpu.memory_space<vmem>>, %arg3: memref<16x128xf32, #tpu.memory_space<vmem>>, %arg4: memref<1x1x128xf32, #tpu.memory_space<vmem>>, %arg5: memref<1x1x128xf32, #tpu.memory_space<vmem>>, %arg6: memref<16x128xf32, #tpu.memory_space<vmem>>, %arg7: memref<16x128xf32, #tpu.memory_space<vmem>>) attributes {dimension_semantics = [#tpu.dimension_semantics<parallel>, #tpu.dimension_semantics<arbitrary>], iteration_bounds = array<i64: 1, 1>, scalar_prefetch = 0 : i64, scratch_operands = 2 : i64, tpu.core_type = #tpu.core_type<tc>, window_params = [{transform_indices = @transform_0, window_bounds = array<i64: 16, 128>}, {transform_indices = @transform_1, window_bounds = array<i64: 16, 128>}, {transform_indices = @transform_2, window_bounds = array<i64: 1, 1, 128>}, {transform_indices = @transform_3, window_bounds = array<i64: 1, 1, 128>}]} {
    %c0_i32 = arith.constant 0 : i32
    %0 = arith.cmpi eq, %arg1, %c0_i32 : i32
    %1 = arith.extui %0 : i1 to i32
    %c0_i32_0 = arith.constant 0 : i32
    %2 = arith.cmpi ne, %1, %c0_i32_0 : i32
    scf.if %2 {
      %cst = arith.constant 0.000000e+00 : f32
      %16 = vector.broadcast %cst : f32 to vector<16x128xf32>
      %c0_14 = arith.constant 0 : index
      %c0_15 = arith.constant 0 : index
      %17 = vector.load %arg6[%c0_14, %c0_15] : memref<16x128xf32, #tpu.memory_space<vmem>>, vector<16x128xf32>
      tpu.vector_store %arg6[%c0_14, %c0_15], %16 {strides = array<i32>} : memref<16x128xf32, #tpu.memory_space<vmem>>, vector<16x128xf32>,
      %cst_16 = arith.constant 0.000000e+00 : f32
      %18 = vector.broadcast %cst_16 : f32 to vector<16x128xf32>
      %c0_17 = arith.constant 0 : index
      %c0_18 = arith.constant 0 : index
      %19 = vector.load %arg7[%c0_17, %c0_18] : memref<16x128xf32, #tpu.memory_space<vmem>>, vector<16x128xf32>
      tpu.vector_store %arg7[%c0_17, %c0_18], %18 {strides = array<i32>} : memref<16x128xf32, #tpu.memory_space<vmem>>, vector<16x128xf32>,
    } else {
    }
    %c0 = arith.constant 0 : index
    %c0_1 = arith.constant 0 : index
    %3 = vector.load %arg2[%c0, %c0_1] : memref<16x128xf32, #tpu.memory_space<vmem>>, vector<16x128xf32>
    %c0_2 = arith.constant 0 : index
    %c0_3 = arith.constant 0 : index
    %4 = vector.load %arg3[%c0_2, %c0_3] : memref<16x128xf32, #tpu.memory_space<vmem>>, vector<16x128xf32>
    %c0_4 = arith.constant 0 : index
    %c0_5 = arith.constant 0 : index
    %5 = vector.load %arg6[%c0_4, %c0_5] : memref<16x128xf32, #tpu.memory_space<vmem>>, vector<16x128xf32>
    %6 = arith.mulf %3, %4 : vector<16x128xf32>
    %7 = arith.addf %5, %6 : vector<16x128xf32>
    %c0_6 = arith.constant 0 : index
    %c0_7 = arith.constant 0 : index
    %8 = vector.load %arg6[%c0_6, %c0_7] : memref<16x128xf32, #tpu.memory_space<vmem>>, vector<16x128xf32>
    tpu.vector_store %arg6[%c0_6, %c0_7], %7 {strides = array<i32>} : memref<16x128xf32, #tpu.memory_space<vmem>>, vector<16x128xf32>,
    %c0_8 = arith.constant 0 : index
    %c0_9 = arith.constant 0 : index
    %9 = vector.load %arg7[%c0_8, %c0_9] : memref<16x128xf32, #tpu.memory_space<vmem>>, vector<16x128xf32>
    %10 = arith.addf %3, %4 : vector<16x128xf32>
    %11 = arith.addf %9, %10 : vector<16x128xf32>
    %c0_10 = arith.constant 0 : index
    %c0_11 = arith.constant 0 : index
    %12 = vector.load %arg7[%c0_10, %c0_11] : memref<16x128xf32, #tpu.memory_space<vmem>>, vector<16x128xf32>
    tpu.vector_store %arg7[%c0_10, %c0_11], %11 {strides = array<i32>} : memref<16x128xf32, #tpu.memory_space<vmem>>, vector<16x128xf32>,
    %c0_i32_12 = arith.constant 0 : i32
    %13 = arith.cmpi eq, %arg1, %c0_i32_12 : i32
    %14 = arith.extui %13 : i1 to i32
    %c0_i32_13 = arith.constant 0 : i32
    %15 = arith.cmpi ne, %14, %c0_i32_13 : i32
    scf.if %15 {
      %c0_14 = arith.constant 0 : index
      %c0_15 = arith.constant 0 : index
      %16 = vector.load %arg6[%c0_14, %c0_15] : memref<16x128xf32, #tpu.memory_space<vmem>>, vector<16x128xf32>
      %cst = arith.constant dense<0.000000e+00> : vector<128xf32>
      %17 = vector.multi_reduction <add>, %16, %cst [0] : vector<16x128xf32> to vector<128xf32>
      %18 = vector.shape_cast %17 : vector<128xf32> to vector<1x128xf32>
      %c0_16 = arith.constant 0 : index
      %c0_17 = arith.constant 0 : index
      %c0_18 = arith.constant 0 : index
      %19 = vector.load %arg4[%c0_16, %c0_17, %c0_18] : memref<1x1x128xf32, #tpu.memory_space<vmem>>, vector<1x1x128xf32>
      %20 = vector.shape_cast %19 : vector<1x1x128xf32> to vector<1x128xf32>
      %21 = vector.shape_cast %18 : vector<1x128xf32> to vector<1x1x128xf32>
      tpu.vector_store %arg4[%c0_16, %c0_17, %c0_18], %21 {strides = array<i32>} : memref<1x1x128xf32, #tpu.memory_space<vmem>>, vector<1x1x128xf32>,
      %c0_19 = arith.constant 0 : index
      %c0_20 = arith.constant 0 : index
      %22 = vector.load %arg7[%c0_19, %c0_20] : memref<16x128xf32, #tpu.memory_space<vmem>>, vector<16x128xf32>
      %cst_21 = arith.constant dense<0.000000e+00> : vector<128xf32>
      %23 = vector.multi_reduction <add>, %22, %cst_21 [0] : vector<16x128xf32> to vector<128xf32>
      %24 = vector.shape_cast %23 : vector<128xf32> to vector<1x128xf32>
      %c0_22 = arith.constant 0 : index
      %c0_23 = arith.constant 0 : index
      %c0_24 = arith.constant 0 : index
      %25 = vector.load %arg5[%c0_22, %c0_23, %c0_24] : memref<1x1x128xf32, #tpu.memory_space<vmem>>, vector<1x1x128xf32>
      %26 = vector.shape_cast %25 : vector<1x1x128xf32> to vector<1x128xf32>
      %27 = vector.shape_cast %24 : vector<1x128xf32> to vector<1x1x128xf32>
      tpu.vector_store %arg5[%c0_22, %c0_23, %c0_24], %27 {strides = array<i32>} : memref<1x1x128xf32, #tpu.memory_space<vmem>>, vector<1x1x128xf32>,
    } else {
    }
    return
  }
  func.func @transform_0(%arg0: i32, %arg1: i32) -> (i32, i32) {
    %c1_i32 = arith.constant 1 : i32
    %0 = arith.muli %arg0, %c1_i32 : i32
    %1 = arith.addi %0, %arg1 : i32
    %c0_i32 = arith.constant 0 : i32
    %2 = arith.minsi %1, %c0_i32 : i32
    %c0_i32_0 = arith.constant 0 : i32
    %c0_i32_1 = arith.constant 0 : i32
    return %2, %c0_i32_0 : i32, i32
  }
  func.func @transform_1(%arg0: i32, %arg1: i32) -> (i32, i32) {
    %c1_i32 = arith.constant 1 : i32
    %0 = arith.muli %arg0, %c1_i32 : i32
    %1 = arith.addi %0, %arg1 : i32
    %c0_i32 = arith.constant 0 : i32
    %2 = arith.minsi %1, %c0_i32 : i32
    %c0_i32_0 = arith.constant 0 : i32
    %c0_i32_1 = arith.constant 0 : i32
    return %2, %c0_i32_0 : i32, i32
  }
  func.func @transform_2(%arg0: i32, %arg1: i32) -> (i32, i32, i32) {
    %c0_i32 = arith.constant 0 : i32
    %c0_i32_0 = arith.constant 0 : i32
    %c0_i32_1 = arith.constant 0 : i32
    return %arg0, %c0_i32, %c0_i32_0 : i32, i32, i32
  }
  func.func @transform_3(%arg0: i32, %arg1: i32) -> (i32, i32, i32) {
    %c0_i32 = arith.constant 0 : i32
    %c0_i32_0 = arith.constant 0 : i32
    %c0_i32_1 = arith.constant 0 : i32
    return %arg0, %c0_i32, %c0_i32_0 : i32, i32, i32
  }
}

</mosaic_0001>

<llo_original>
// kernel: tpu_custom_call.1
$region0: #{tpu_custom_call.1}
  #allocation0 [shape = 'u32[]', space=smem, size = 0x4, offset = 0x4, fixed_abs, tag = 'smem constant byte address 0x4 - core index']
  #allocation1 [shape = 'u32[144,128]{1,0:T(1,128)}', space=vmem, size = 0x12000, scoped, tag = 'internal scratch']
  #allocation2 [shape = 'f32[16,128]{1,0:T(8,128)}', space=vmem, size = 0x2000, scoped, tag = 'scratch operand']
  #allocation3 [shape = 'f32[16,128]{1,0:T(8,128)}', space=vmem, size = 0x2000, scoped, tag = 'scratch operand']
  %s0 = inlined_call_operand.hbm [shape: f32[16,128], index: 0, kind: input, shape index: {}]
  %s1 = inlined_call_operand.hbm [shape: f32[16,128], index: 1, kind: input, shape index: {}]
  %s2 = inlined_call_operand.hbm [shape: f32[1,1,128], index: 2, kind: output, shape index: {0}]
  %s3 = inlined_call_operand.hbm [shape: f32[1,1,128], index: 3, kind: output, shape index: {1}]
  %4 = xla_tuple %s2, %s3
  %s5 = sld [smem:[#allocation0]]
  $region42: #{tpu_custom_call.1} parent=0
    _
  %s7 = ssub.s32 1, %s5
  %s8 = scalar_select 0, %s7, %s5
  $region1: #{tpu_custom_call.1} parent=0
    #allocation4 [shape = 'u8[8192]{0}', space=vmem, size = 0x2000, scoped, tag = 'input window, operand 0, single buffered']
    #allocation5 [shape = 's32[1]{0}', space=sflag, size = 0x4, scoped, tag = 'scoped memory for tpu_custom_call.1']
    #allocation6 [shape = 's32[1]{0}', space=sflag, size = 0x4, scoped, tag = 'scoped memory for tpu_custom_call.1']
    #allocation7 [shape = 'u8[8192]{0}', space=vmem, size = 0x2000, scoped, tag = 'input window, operand 1, single buffered']
    #allocation8 [shape = 's32[1]{0}', space=sflag, size = 0x4, scoped, tag = 'scoped memory for tpu_custom_call.1']
    #allocation9 [shape = 'u8[512]{0}', space=vmem, size = 0x400, scoped, tag = 'output window, operand 0, single buffered']
    #allocation10 [shape = 'u8[512]{0}', space=vmem, size = 0x400, scoped, tag = 'output window, operand 1, single buffered']
    #allocation11 [shape = 's32[1]{0}', space=sflag, size = 0x4, scoped, tag = 'scoped memory for tpu_custom_call.1']
    %9 = vsyncpa [#allocation5], 0
    %10 = vsyncpa [#allocation8], 0
    %11 = vsyncpa [#allocation6], 0
    %12 = vsyncpa [#allocation11], 0
    // Predicated region
    $region2: #{tpu_custom_call.1} parent=1 // pred_check
      _
    $region3: #{tpu_custom_call.1} parent=1 // pred_check_branch
      %14 = sbr.rel (0) target = $region5
    $region4: #{tpu_custom_call.1} parent=1 // pred_region
      %s15 = sadd.s32 0, 0
      %p16 = scmp.lt.s32.totalorder %s15, 0
      %s17 = scalar_select %p16, %s15, 0
      %s18 = smul.u32 2, %s17
      %s20 = ssub.s32 256, 256
      %21 = vsyncadd [#allocation5], %s20
      %s22 = smul.addr %s18, 128
      %s23 = scalar_lea.hbm %s0, %s22
      %s24 = sshll.u32 [#allocation4], 4
      %s25 = int_to_ptr.vmem [resolvable:$true] %s24
      %30 = dma.hbm_to_vmem [thread:$0]  %s23, 256, %s25, [#allocation5], 128, 128, 8
    $region5: #{tpu_custom_call.1} parent=1 // pred_fallthru
      _
    // Predicated region
    $region6: #{tpu_custom_call.1} parent=1 // pred_check
      _
    $region7: #{tpu_custom_call.1} parent=1 // pred_check_branch
      %32 = sbr.rel (0) target = $region9
    $region8: #{tpu_custom_call.1} parent=1 // pred_region
      %s33 = sadd.s32 0, 0
      %p34 = scmp.lt.s32.totalorder %s33, 0
      %s35 = scalar_select %p34, %s33, 0
      %s36 = smul.u32 2, %s35
      %s38 = ssub.s32 256, 256
      %39 = vsyncadd [#allocation8], %s38
      %s40 = smul.addr %s36, 128
      %s41 = scalar_lea.hbm %s1, %s40
      %s42 = sshll.u32 [#allocation7], 4
      %s43 = int_to_ptr.vmem [resolvable:$true] %s42
      %48 = dma.hbm_to_vmem [thread:$0]  %s41, 256, %s43, [#allocation8], 128, 128, 8
    $region9: #{tpu_custom_call.1} parent=1 // pred_fallthru
      _
    // Predicated region
    $region10: #{tpu_custom_call.1} parent=1 // pred_check
      _
    $region11: #{tpu_custom_call.1} parent=1 // pred_check_branch
      %50 = sbr.rel (0) target = $region13
    $region12: #{tpu_custom_call.1} parent=1 // pred_region
      %51 = dma.done [#allocation5], 256
    $region13: #{tpu_custom_call.1} parent=1 // pred_fallthru
      _
    // Predicated region
    $region14: #{tpu_custom_call.1} parent=1 // pred_check
      _
    $region15: #{tpu_custom_call.1} parent=1 // pred_check_branch
      %53 = sbr.rel (0) target = $region17
    $region16: #{tpu_custom_call.1} parent=1 // pred_region
      %54 = dma.done [#allocation8], 256
    $region17: #{tpu_custom_call.1} parent=1 // pred_fallthru
      _
    %s55 = sadd.s32 0, 0
    %p56 = scmp.lt.s32.totalorder %s55, 0
    %s57 = scalar_select %p56, %s55, 0
    %s58 = smul.u32 2, %s57
    %s59 = sadd.s32 0, 0
    %p60 = scmp.lt.s32.totalorder %s59, 0
    %s61 = scalar_select %p60, %s59, 0
    %s62 = smul.u32 2, %s61
    %p63 = scmp.eq.s32.totalorder 0, 0
    // Predicated region
    $region18: #{tpu_custom_call.1} parent=1 // pred_check
      %p64 = pneg %p63
    $region19: #{tpu_custom_call.1} parent=1 // pred_check_branch
      %66 = sbr.rel (%p64) target = $region21
    $region20: #{tpu_custom_call.1} parent=1 // pred_region
      %67 = vst [vmem:[#allocation2] sm:$0xff] 0.0
      %68 = vst [vmem:[#allocation2 + $0x8] sm:$0xff] 0.0
      %69 = vst [vmem:[#allocation3] sm:$0xff] 0.0
      %70 = vst [vmem:[#allocation3 + $0x8] sm:$0xff] 0.0
    $region21: #{tpu_custom_call.1} parent=1 // pred_fallthru
      _
    %v71 = vld [vmem:[#allocation4] sm:$0xff]
    %v72 = vld [vmem:[#allocation4 + $0x8] sm:$0xff]
    %v73 = vld [vmem:[#allocation7] sm:$0xff]
    %v74 = vld [vmem:[#allocation7 + $0x8] sm:$0xff]
    %v75 = vld [vmem:[#allocation2] sm:$0xff]
    %v76 = vld [vmem:[#allocation2 + $0x8] sm:$0xff]
    %v77 = vmul.f32 %v71, %v73
    %v78 = vmul.f32 %v72, %v74
    %v79 = vadd.f32 %v75, %v77
    %v80 = vadd.f32 %v76, %v78
    %81 = vst [vmem:[#allocation2] sm:$0xff] %v79
    %82 = vst [vmem:[#allocation2 + $0x8] sm:$0xff] %v80
    %v83 = vld [vmem:[#allocation3] sm:$0xff]
    %v84 = vld [vmem:[#allocation3 + $0x8] sm:$0xff]
    %v85 = vadd.f32 %v71, %v73
    %v86 = vadd.f32 %v72, %v74
    %v87 = vadd.f32 %v83, %v85
    %v88 = vadd.f32 %v84, %v86
    %89 = vst [vmem:[#allocation3] sm:$0xff] %v87
    %90 = vst [vmem:[#allocation3 + $0x8] sm:$0xff] %v88
    // Predicated region
    $region22: #{tpu_custom_call.1} parent=1 // pred_check
      %p91 = pneg %p63
    $region23: #{tpu_custom_call.1} parent=1 // pred_check_branch
      %93 = sbr.rel (%p91) target = $region25
    $region24: #{tpu_custom_call.1} parent=1 // pred_region
      %v94 = vld [vmem:[#allocation2] sm:$0xff]
      %v95 = vld [vmem:[#allocation2 + $0x8] sm:$0xff]
      %v96 = vadd.f32 %v94, %v95
      %v97 = vrot.slane %v96, 4
      %v98 = vadd.f32 %v96, %v97
      %v99 = vrot.slane %v98, 2
      %v100 = vadd.f32 %v98, %v99
      %v101 = vrot.slane %v100, 1
      %v102 = vadd.f32 %v100, %v101
      %103 = vst [vmem:[#allocation9] sm:$0x1] %v102
      %v104 = vld [vmem:[#allocation3] sm:$0xff]
      %v105 = vld [vmem:[#allocation3 + $0x8] sm:$0xff]
      %v106 = vadd.f32 %v104, %v105
      %v107 = vrot.slane %v106, 4
      %v108 = vadd.f32 %v106, %v107
      %v109 = vrot.slane %v108, 2
      %v110 = vadd.f32 %v108, %v109
      %v111 = vrot.slane %v110, 1
      %v112 = vadd.f32 %v110, %v111
      %113 = vst [vmem:[#allocation10] sm:$0x1] %v112
    $region25: #{tpu_custom_call.1} parent=1 // pred_fallthru
      _
    // Predicated region
    $region26: #{tpu_custom_call.1} parent=1 // pred_check
      _
    $region27: #{tpu_custom_call.1} parent=1 // pred_check_branch
      %115 = sbr.rel (0) target = $region29
    $region28: #{tpu_custom_call.1} parent=1 // pred_region
      %s117 = ssub.s32 16, 16
      %118 = vsyncadd [#allocation6], %s117
      %s120 = sshll.u32 [#allocation9], 4
      %s121 = int_to_ptr.vmem [resolvable:$true] %s120
      %123 = dma.vmem_to_hbm [thread:$0]  %s121, 16, %s2, [#allocation6]
    $region29: #{tpu_custom_call.1} parent=1 // pred_fallthru
      _
    // Predicated region
    $region30: #{tpu_custom_call.1} parent=1 // pred_check
      _
    $region31: #{tpu_custom_call.1} parent=1 // pred_check_branch
      %125 = sbr.rel (0) target = $region33
    $region32: #{tpu_custom_call.1} parent=1 // pred_region
      %s127 = ssub.s32 16, 16
      %128 = vsyncadd [#allocation11], %s127
      %s130 = sshll.u32 [#allocation10], 4
      %s131 = int_to_ptr.vmem [resolvable:$true] %s130
      %133 = dma.vmem_to_hbm [thread:$0]  %s131, 16, %s3, [#allocation11]
    $region33: #{tpu_custom_call.1} parent=1 // pred_fallthru
      _
    // Predicated region
    $region34: #{tpu_custom_call.1} parent=1 // pred_check
      _
    $region35: #{tpu_custom_call.1} parent=1 // pred_check_branch
      %135 = sbr.rel (0) target = $region37
    $region36: #{tpu_custom_call.1} parent=1 // pred_region
      %136 = dma.done [#allocation6], 16
    $region37: #{tpu_custom_call.1} parent=1 // pred_fallthru
      _
    // Predicated region
    $region38: #{tpu_custom_call.1} parent=1 // pred_check
      _
    $region39: #{tpu_custom_call.1} parent=1 // pred_check_branch
      %138 = sbr.rel (0) target = $region41
    $region40: #{tpu_custom_call.1} parent=1 // pred_region
      %139 = dma.done [#allocation11], 16
    $region41: #{tpu_custom_call.1} parent=1 // pred_fallthru
      _
    %140 = vsyncpa [#allocation5], 1
    %141 = vsyncpa [#allocation8], 1
    %142 = vsyncpa [#allocation6], 1
    %143 = vsyncpa [#allocation11], 1

</llo_original>
